<compile_context>
chip_gen: v7x
topology: tpu7x:2x2x1
jax: 0.10.0
libtpu: 0.0.40
codegen_flags: <defaults>
</compile_context>

<pallas_src>
import functools

import numpy as np
import jax
import jax.numpy as jnp
from jax import lax
from jax.experimental import pallas as pl
from jax.experimental.pallas import tpu as pltpu

_LANE = 128
_SUB = 8


def _round_up(v, m):
    return ((v + m - 1) // m) * m


def _main_kernel(x_ref, g_ref, rt_ref, ct_ref, sp_ref, den_ref, *,
                 n_gallery_cols, block_k):
    """Per-element positive-min and negative exp-sum accumulation.

    x_ref  : (TM, Dp)  row tile of x, pre-scaled by 1/temp  (matmul dtype)
    g_ref  : (TK, Dp)  tile of the contrast set G = [y.flatten(0,1); x]
    rt_ref : (1, TM)   track id per x element (-1 => padding lane)
    ct_ref : (TK, 1)   track id per G row     (-1 => padding row)
    sp_ref : (1, TM)   OUT accumulator: min positive similarity / temp  (== log num)
    den_ref: (1, TM)   OUT accumulator: sum of exp(negative similarity / temp)
    """
    k = pl.program_id(1)

    @pl.when(k == 0)
    def _init():
        sp_ref[...] = jnp.full(sp_ref.shape, jnp.inf, dtype=sp_ref.dtype)
        den_ref[...] = jnp.zeros(den_ref.shape, dtype=den_ref.dtype)

    # Transposed orientation: rows of s index G vectors, lanes index x elements, so
    # axis=0 reductions give lane-dense (1, TM) partials (no width-1 stores).
    # 1/temp is already folded into x, so s is sim/temp directly.
    s = lax.dot_general(g_ref[...], x_ref[...], (((1,), (1,)), ((), ())),
                        preferred_element_type=jnp.float32)            # (TK, TM)

    col_t = ct_ref[...]                                                 # (TK, 1)
    row_t = rt_ref[...]                                                 # (1, TM)

    # Denominator: other real tracks (gallery + static-contrast x columns).
    # Mask BEFORE exp so masked entries contribute exactly 0 (exp(-inf) == 0).
    neg = (col_t != row_t) & (col_t >= 0)                               # (TK, TM)
    den_ref[...] += jnp.sum(jnp.exp(jnp.where(neg, s, -jnp.inf)),
                            axis=0, keepdims=True)

    # Positive path: only G tiles overlapping the gallery region carry positives,
    # so static-contrast-only tiles skip the compare/select/min entirely.
    @pl.when(k * block_k < n_gallery_cols)
    def _pos():
        grow = k * block_k + lax.broadcasted_iota(jnp.int32, (block_k, 1), 0)
        pos = (col_t == row_t) & (grow < n_gallery_cols)                # (TK, TM)
        sp_ref[...] = jnp.minimum(
            sp_ref[...],
            jnp.min(jnp.where(pos, s, jnp.inf), axis=0, keepdims=True))


def _pair_log_kernel(num_ref, den_ref, out_ref, *, n_real, ci, cj):
    """Reference's (N,1)+(N,) -> (N,N) broadcast term, tiled.

    num_ref: (CI, 1)  exp(sp) column chunk (padding entries are 1.0, i.e. finite)
    den_ref: (1, CJ)  den row chunk        (padding entries are 1.0)
    out_ref: (1, 1)   per-i-chunk partial sum of log(den[j] + num[i]), accumulated
                      over the j grid axis.
    """
    i = pl.program_id(0)
    j = pl.program_id(1)

    @pl.when(j == 0)
    def _init():
        out_ref[...] = jnp.zeros(out_ref.shape, dtype=out_ref.dtype)

    gi = i * ci + lax.broadcasted_iota(jnp.int32, (ci, 1), 0)           # (CI, 1)
    gj = j * cj + lax.broadcasted_iota(jnp.int32, (1, cj), 1)           # (1, CJ)
    valid = (gi < n_real) & (gj < n_real)                               # (CI, CJ)

    pair = den_ref[...] + num_ref[...]                                  # (CI, CJ), > 0
    out_ref[...] += jnp.sum(jnp.where(valid, jnp.log(pair), 0.0), keepdims=True)


def contrastive_loss(x, track_idxs, y, temp=0.05, *, block_m=512, block_k=256,
                     matmul_dtype=jnp.bfloat16, pair_chunk=512):
    """Forward pass of ContrastiveLoss with the default module config.

    matmul_dtype: bf16 by default (f32 accumulation on the MXU).  Use jnp.float32
    for exact parity with the reference (multi-pass MXU, 2x HBM traffic for G).
    """
    x = jnp.asarray(x, jnp.float32)
    y = jnp.asarray(y, jnp.float32)
    N, D = x.shape
    n, Q, D2 = y.shape
    assert D == D2
    nQ = n * Q
    M = nQ + N                      # gallery columns + static-contrast x columns

    # ---- hardware-friendly padding (masked out inside the kernels) ----
    block_m = max(_LANE, _round_up(block_m, _LANE))
    block_k = max(_LANE, _round_up(block_k, _LANE))
    TM = min(block_m, _round_up(N, _LANE))
    TK = min(block_k, _round_up(M, _LANE))
    N_pad = _round_up(N, TM)
    M_pad = _round_up(M, TK)
    D_pad = _round_up(D, _LANE)

    inv_temp = float(1.0 / temp)
    # Fold 1/temp into x here: it fuses with the pad/cast XLA already does and removes
    # the per-grid-step scale+cast of the resident x tile (review item #8).
    xp = jnp.pad(x * inv_temp, ((0, N_pad - N), (0, D_pad - D))).astype(matmul_dtype)
    g = jnp.concatenate([y.reshape(nQ, D), x], axis=0)                  # (M, D), unscaled
    gp = jnp.pad(g, ((0, M_pad - M), (0, D_pad - D))).astype(matmul_dtype)

    ti = jnp.asarray(track_idxs, jnp.int32).reshape(N)
    gallery_t = jnp.repeat(jnp.arange(n, dtype=jnp.int32), Q)           # (nQ,)
    col_t = jnp.concatenate([gallery_t, ti], axis=0)                    # (M,)
    ct = jnp.pad(col_t, (0, M_pad - M), constant_values=-1).reshape(M_pad, 1)
    rt = jnp.pad(ti, (0, N_pad - N), constant_values=-1).reshape(1, N_pad)

    grid = (N_pad // TM, M_pad // TK)

    # ---- VMEM budget: double-buffered tiles + lane/sublane padding + live temps ----
    itemsize = np.dtype(matmul_dtype).itemsize
    est = (2 * (TM + TK) * D_pad * itemsize      # double-buffered x / G tiles
           + 2 * TK * _LANE * 4                  # ct block: (TK,1) lane-padded to (TK,128)
           + 2 * _SUB * TM * 4                   # rt block: (1,TM) sublane-padded to (8,TM)
           + 2 * 2 * _SUB * TM * 4               # sp/den output blocks (double-buffered)
           + 5 * TK * TM * 4)                    # live (TK,TM) f32 temps: s, masks, exp, ...
    try:
        vmem_cap = int(pltpu.get_tpu_info().vmem_capacity_bytes)
    except Exception:
        vmem_cap = 64 << 20                      # conservative: v7x has 64 MiB / TC
    vmem_limit = int(min(3 * vmem_cap // 4, max(32 << 20, 2 * est)))

    main = functools.partial(_main_kernel, n_gallery_cols=nQ, block_k=TK)
    sp, den = pl.pallas_call(
        main,
        grid=grid,
        in_specs=[
            pl.BlockSpec((TM, D_pad), lambda r, k: (r, 0)),   # x row tile (resident over k)
            pl.BlockSpec((TK, D_pad), lambda r, k: (k, 0)),   # G tile (streamed over k)
            pl.BlockSpec((1, TM), lambda r, k: (0, r)),       # x track ids
            pl.BlockSpec((TK, 1), lambda r, k: (k, 0)),       # G track ids
        ],
        out_specs=[
            pl.BlockSpec((1, TM), lambda r, k: (0, r)),       # sp  (lane-dense accumulator)
            pl.BlockSpec((1, TM), lambda r, k: (0, r)),       # den (lane-dense accumulator)
        ],
        out_shape=(jax.ShapeDtypeStruct((1, N_pad), jnp.float32),
                   jax.ShapeDtypeStruct((1, N_pad), jnp.float32)),
        compiler_params=pltpu.CompilerParams(
            dimension_semantics=("parallel", "arbitrary"),
            vmem_limit_bytes=vmem_limit,
        ),
    )(xp, gp, rt, ct)

    # ---- epilogue: -log(num/(den+num)) with the torch (N,1)+(N,) -> (N,N) broadcast ----
    #   loss = (1/N^2) sum_{i,j} log(den[j] + num[i]) - (1/N) sum_i sp[i]
    sp_v = sp[0, :N]                       # (N,)  == sim_p/temp == log(num), finite
    den_v = den[0, :N]                     # (N,)
    sp_sum = jnp.sum(sp_v)

    C = _round_up(min(pair_chunk, _round_up(N, _LANE)), _LANE)
    NE = _round_up(N, C)
    NI = NE // C
    # Pad with 1.0 so padded pairs stay finite/positive (no inf/NaN in arithmetic paths).
    num_col = jnp.pad(jnp.exp(sp_v), (0, NE - N), constant_values=1.0).reshape(NE, 1)
    den_row = jnp.pad(den_v, (0, NE - N), constant_values=1.0).reshape(1, NE)

    epi = functools.partial(_pair_log_kernel, n_real=N, ci=C, cj=C)
    parts = pl.pallas_call(
        epi,
        grid=(NI, NI),
        in_specs=[
            pl.BlockSpec((C, 1), lambda i, j: (i, 0)),        # num column chunk
            pl.BlockSpec((1, C), lambda i, j: (0, j)),        # den row chunk
        ],
        out_specs=pl.BlockSpec((1, 1), lambda i, j: (0, i)),  # per-i partial sum
        out_shape=jax.ShapeDtypeStruct((1, NI), jnp.float32),
        compiler_params=pltpu.CompilerParams(
            dimension_semantics=("parallel", "arbitrary")),
    )(num_col, den_row)

    return jnp.sum(parts) / float(N * N) - sp_sum / float(N)


def _reference_loss(x, track_idxs, y, temp):
    """Plain-numpy replication of ContrastiveLoss.forward_ with the default config."""
    n, Q, D = y.shape
    y_idxs = np.arange(n)
    nums, dens = [], []
    for uid in np.unique(track_idxs):
        x_map = track_idxs == uid
        y_map = y_idxs == uid
        x_pos = x[x_map]
        y_pos = y[y_map].reshape(-1, D)
        sim_p = (x_pos @ y_pos.T).min(axis=1, keepdims=True)
        x_neg = x[~x_map]
        y_neg = y[~y_map].reshape(-1, D)
        sim_n = np.concatenate([x_pos @ y_neg.T, x_pos @ x_neg.T], axis=1)
        nums.append(np.exp(sim_p / temp))
        dens.append(np.exp(sim_n / temp).sum(axis=-1))
    num = np.concatenate(nums, axis=0)   # (N, 1)
    den = np.concatenate(dens, axis=0)   # (N,)
    loss = -np.log(num / (den + num))    # broadcasts to (N, N), as in the torch code
    return float(loss.mean())


if __name__ == "__main__":
    key = jax.random.PRNGKey(0)

    # ---- small config ----
    N, D, n_tracks, Q = 8, 32, 4, 8
    k1, k2, k3 = jax.random.split(key, 3)
    x = jax.random.normal(k1, (N, D), jnp.float32)
    y = jax.random.normal(k2, (n_tracks, Q, D), jnp.float32)
    # L2-normalized embeddings (standard usage; keeps exp(sim/temp) finite).
    x = x / jnp.linalg.norm(x, axis=-1, keepdims=True)
    y = y / jnp.linalg.norm(y, axis=-1, keepdims=True)
    track_idxs = jnp.array([0, 0, 1, 1, 2, 2, 3, 3], jnp.int32)

    ref = _reference_loss(np.asarray(x), np.asarray(track_idxs), np.asarray(y), 0.05)

    # exact-parity path (f32 matmul)
    out_f32 = jax.block_until_ready(
        contrastive_loss(x, track_idxs, y, temp=0.05, matmul_dtype=jnp.float32))
    assert np.allclose(float(out_f32), ref, rtol=1e-4, atol=1e-4), (float(out_f32), ref)

    # default fast path (bf16 matmul, f32 accumulation)
    out_bf16 = jax.block_until_ready(contrastive_loss(x, track_idxs, y, temp=0.05))
    assert np.isfinite(float(out_bf16))
    assert np.allclose(float(out_bf16), ref, rtol=1e-1, atol=1e-1), (float(out_bf16), ref)

    # ---- multi-tile config: exercises k accumulation, gallery gate, multiple row tiles ----
    N2, D2n, n2, Q2 = 160, 32, 24, 8
    k4, k5, k6 = jax.random.split(k3, 3)
    x2 = jax.random.normal(k4, (N2, D2n), jnp.float32)
    y2 = jax.random.normal(k5, (n2, Q2, D2n), jnp.float32)
    x2 = x2 / jnp.linalg.norm(x2, axis=-1, keepdims=True)
    y2 = y2 / jnp.linalg.norm(y2, axis=-1, keepdims=True)
    t2 = jax.random.randint(k6, (N2,), 0, n2, jnp.int32)

    ref2 = _reference_loss(np.asarray(x2), np.asarray(t2), np.asarray(y2), 0.05)
    out2 = jax.block_until_ready(
        contrastive_loss(x2, t2, y2, temp=0.05, block_m=128, block_k=128,
                         matmul_dtype=jnp.float32))
    assert np.allclose(float(out2), ref2, rtol=1e-4, atol=1e-4), (float(out2), ref2)

    print("KERNEL_OK")
</pallas_src>

<mosaic_0001>
module attributes {stable_mosaic.version = 11 : i64} {
  func.func @_main_kernel(%arg0: i32, %arg1: i32, %arg2: memref<128x128xf32, #tpu.memory_space<vmem>>, %arg3: memref<128x128xf32, #tpu.memory_space<vmem>>, %arg4: memref<1x128xi32, #tpu.memory_space<vmem>>, %arg5: memref<128x1xi32, #tpu.memory_space<vmem>>, %arg6: memref<1x128xf32, #tpu.memory_space<vmem>>, %arg7: memref<1x128xf32, #tpu.memory_space<vmem>>) attributes {dimension_semantics = [#tpu.dimension_semantics<parallel>, #tpu.dimension_semantics<arbitrary>], iteration_bounds = array<i64: 1, 1>, scalar_prefetch = 0 : i64, scratch_operands = 0 : i64, tpu.core_type = #tpu.core_type<tc>, window_params = [{transform_indices = @transform_0, window_bounds = array<i64: 128, 128>}, {transform_indices = @transform_1, window_bounds = array<i64: 128, 128>}, {transform_indices = @transform_2, window_bounds = array<i64: 1, 128>}, {transform_indices = @transform_3, window_bounds = array<i64: 128, 1>}, {transform_indices = @transform_4, window_bounds = array<i64: 1, 128>}, {transform_indices = @transform_5, window_bounds = array<i64: 1, 128>}]} {
    %c0_i32 = arith.constant 0 : i32
    %0 = arith.cmpi eq, %arg1, %c0_i32 : i32
    %1 = arith.extui %0 : i1 to i32
    %c0_i32_0 = arith.constant 0 : i32
    %2 = arith.cmpi ne, %1, %c0_i32_0 : i32
    scf.if %2 {
      %cst_16 = arith.constant 0x7F800000 : f32
      %27 = vector.broadcast %cst_16 : f32 to vector<1x128xf32>
      %c0_17 = arith.constant 0 : index
      %c0_18 = arith.constant 0 : index
      %28 = vector.load %arg6[%c0_17, %c0_18] : memref<1x128xf32, #tpu.memory_space<vmem>>, vector<1x128xf32>
      tpu.vector_store %arg6[%c0_17, %c0_18], %27 {strides = array<i32>} : memref<1x128xf32, #tpu.memory_space<vmem>>, vector<1x128xf32>,
      %cst_19 = arith.constant 0.000000e+00 : f32
      %29 = vector.broadcast %cst_19 : f32 to vector<1x128xf32>
      %c0_20 = arith.constant 0 : index
      %c0_21 = arith.constant 0 : index
      %30 = vector.load %arg7[%c0_20, %c0_21] : memref<1x128xf32, #tpu.memory_space<vmem>>, vector<1x128xf32>
      tpu.vector_store %arg7[%c0_20, %c0_21], %29 {strides = array<i32>} : memref<1x128xf32, #tpu.memory_space<vmem>>, vector<1x128xf32>,
    } else {
    }
    %c0 = arith.constant 0 : index
    %c0_1 = arith.constant 0 : index
    %3 = vector.load %arg3[%c0, %c0_1] : memref<128x128xf32, #tpu.memory_space<vmem>>, vector<128x128xf32>
    %c0_2 = arith.constant 0 : index
    %c0_3 = arith.constant 0 : index
    %4 = vector.load %arg2[%c0_2, %c0_3] : memref<128x128xf32, #tpu.memory_space<vmem>>, vector<128x128xf32>
    %cst = arith.constant dense<0.000000e+00> : vector<128x128xf32>
    %5 = tpu.matmul %3, %4, %cst {dimension_numbers = #tpu.dot_dimension_numbers<[1], [1], [0], [0], [0, 0, 1, 0], [], []>} : vector<128x128xf32>, vector<128x128xf32>, vector<128x128xf32> -> vector<128x128xf32>
    %c0_4 = arith.constant 0 : index
    %c0_5 = arith.constant 0 : index
    %6 = vector.load %arg5[%c0_4, %c0_5] : memref<128x1xi32, #tpu.memory_space<vmem>>, vector<128x1xi32>
    %c0_6 = arith.constant 0 : index
    %c0_7 = arith.constant 0 : index
    %7 = vector.load %arg4[%c0_6, %c0_7] : memref<1x128xi32, #tpu.memory_space<vmem>>, vector<1x128xi32>
    %8 = vector.broadcast %6 : vector<128x1xi32> to vector<128x128xi32>
    %9 = vector.broadcast %7 : vector<1x128xi32> to vector<128x128xi32>
    %10 = arith.cmpi ne, %8, %9 : vector<128x128xi32>
    %c0_i32_8 = arith.constant 0 : i32
    %11 = vector.broadcast %c0_i32_8 : i32 to vector<128x1xi32>
    %12 = arith.cmpi sge, %6, %11 : vector<128x1xi32>
    %13 = vector.broadcast %12 : vector<128x1xi1> to vector<128x128xi1>
    %14 = arith.andi %10, %13 : vector<128x128xi1>
    %c0_9 = arith.constant 0 : index
    %c0_10 = arith.constant 0 : index
    %15 = vector.load %arg7[%c0_9, %c0_10] : memref<1x128xf32, #tpu.memory_space<vmem>>, vector<1x128xf32>
    %cst_11 = arith.constant 0xFF800000 : f32
    %16 = vector.broadcast %cst_11 : f32 to vector<128x128xf32>
    %17 = arith.select %14, %5, %16 : vector<128x128xi1>, vector<128x128xf32>
    %18 = math.exp %17 : vector<128x128xf32>
    %cst_12 = arith.constant dense<0.000000e+00> : vector<128xf32>
    %19 = vector.multi_reduction <add>, %18, %cst_12 [0] : vector<128x128xf32> to vector<128xf32>
    %20 = vector.shape_cast %19 : vector<128xf32> to vector<1x128xf32>
    %21 = arith.addf %15, %20 : vector<1x128xf32>
    %c0_13 = arith.constant 0 : index
    %c0_14 = arith.constant 0 : index
    %22 = vector.load %arg7[%c0_13, %c0_14] : memref<1x128xf32, #tpu.memory_space<vmem>>, vector<1x128xf32>
    tpu.vector_store %arg7[%c0_13, %c0_14], %21 {strides = array<i32>} : memref<1x128xf32, #tpu.memory_space<vmem>>, vector<1x128xf32>,
    %c128_i32 = arith.constant 128 : i32
    %23 = arith.muli %arg1, %c128_i32 : i32
    %c32_i32 = arith.constant 32 : i32
    %24 = arith.cmpi slt, %23, %c32_i32 : i32
    %25 = arith.extui %24 : i1 to i32
    %c0_i32_15 = arith.constant 0 : i32
    %26 = arith.cmpi ne, %25, %c0_i32_15 : i32
    scf.if %26 {
      %c128_i32_16 = arith.constant 128 : i32
      %27 = arith.muli %arg1, %c128_i32_16 : i32
      %28 = tpu.iota {dimensions = array<i32: 0>} : vector<128x1xi32>
      %29 = vector.broadcast %27 : i32 to vector<128x1xi32>
      %30 = arith.addi %29, %28 : vector<128x1xi32>
      %31 = vector.broadcast %6 : vector<128x1xi32> to vector<128x128xi32>
      %32 = vector.broadcast %7 : vector<1x128xi32> to vector<128x128xi32>
      %33 = arith.cmpi eq, %31, %32 : vector<128x128xi32>
      %c32_i32_17 = arith.constant 32 : i32
      %34 = vector.broadcast %c32_i32_17 : i32 to vector<128x1xi32>
      %35 = arith.cmpi slt, %30, %34 : vector<128x1xi32>
      %36 = vector.broadcast %35 : vector<128x1xi1> to vector<128x128xi1>
      %37 = arith.andi %33, %36 : vector<128x128xi1>
      %c0_18 = arith.constant 0 : index
      %c0_19 = arith.constant 0 : index
      %38 = vector.load %arg6[%c0_18, %c0_19] : memref<1x128xf32, #tpu.memory_space<vmem>>, vector<1x128xf32>
      %cst_20 = arith.constant 0x7F800000 : f32
      %39 = vector.broadcast %cst_20 : f32 to vector<128x128xf32>
      %40 = arith.select %37, %5, %39 : vector<128x128xi1>, vector<128x128xf32>
      %cst_21 = arith.constant dense<0x7F800000> : vector<128xf32>
      %41 = vector.multi_reduction <minimumf>, %40, %cst_21 [0] : vector<128x128xf32> to vector<128xf32>
      %42 = vector.shape_cast %41 : vector<128xf32> to vector<1x128xf32>
      %43 = arith.minimumf %38, %42 : vector<1x128xf32>
      %c0_22 = arith.constant 0 : index
      %c0_23 = arith.constant 0 : index
      %44 = vector.load %arg6[%c0_22, %c0_23] : memref<1x128xf32, #tpu.memory_space<vmem>>, vector<1x128xf32>
      tpu.vector_store %arg6[%c0_22, %c0_23], %43 {strides = array<i32>} : memref<1x128xf32, #tpu.memory_space<vmem>>, vector<1x128xf32>,
    } else {
    }
    return
  }
  func.func @transform_0(%arg0: i32, %arg1: i32) -> (i32, i32) {
    %c0_i32 = arith.constant 0 : i32
    %c0_i32_0 = arith.constant 0 : i32
    return %arg0, %c0_i32 : i32, i32
  }
  func.func @transform_1(%arg0: i32, %arg1: i32) -> (i32, i32) {
    %c0_i32 = arith.constant 0 : i32
    %c0_i32_0 = arith.constant 0 : i32
    return %arg1, %c0_i32 : i32, i32
  }
  func.func @transform_2(%arg0: i32, %arg1: i32) -> (i32, i32) {
    %c0_i32 = arith.constant 0 : i32
    %c0_i32_0 = arith.constant 0 : i32
    return %c0_i32, %arg0 : i32, i32
  }
  func.func @transform_3(%arg0: i32, %arg1: i32) -> (i32, i32) {
    %c0_i32 = arith.constant 0 : i32
    %c0_i32_0 = arith.constant 0 : i32
    return %arg1, %c0_i32 : i32, i32
  }
  func.func @transform_4(%arg0: i32, %arg1: i32) -> (i32, i32) {
    %c0_i32 = arith.constant 0 : i32
    %c0_i32_0 = arith.constant 0 : i32
    return %c0_i32, %arg0 : i32, i32
  }
  func.func @transform_5(%arg0: i32, %arg1: i32) -> (i32, i32) {
    %c0_i32 = arith.constant 0 : i32
    %c0_i32_0 = arith.constant 0 : i32
    return %c0_i32, %arg0 : i32, i32
  }
}

</mosaic_0001>

<llo_original>
// kernel: tpu_custom_call.1
$region0: #{tpu_custom_call.1}
  #allocation0 [shape = 'u32[]', space=smem, size = 0x4, offset = 0x4, fixed_abs, tag = 'smem constant byte address 0x4 - core index']
  #allocation1 [shape = 'u32[144,128]{1,0:T(1,128)}', space=vmem, size = 0x12000, scoped, tag = 'internal scratch']
  %s0 = inlined_call_operand.vmem [shape: f32[128,128], index: 0, kind: input, shape index: {}]
  %s1 = inlined_call_operand.hbm [shape: f32[128,128], index: 1, kind: input, shape index: {}]
  %s2 = inlined_call_operand.vmem [shape: s32[1,128], index: 2, kind: input, shape index: {}]
  %s3 = inlined_call_operand.vmem [shape: s32[128,1], index: 3, kind: input, shape index: {}]
  %s4 = inlined_call_operand.hbm [shape: f32[1,128], index: 4, kind: output, shape index: {0}]
  %s5 = inlined_call_operand.hbm [shape: f32[1,128], index: 5, kind: output, shape index: {1}]
  %6 = xla_tuple %s4, %s5
  %s7 = sld [smem:[#allocation0]]
  $region46: #{tpu_custom_call.1} parent=0
    _
  %s9 = ssub.s32 1, %s7
  %s10 = scalar_select 0, %s9, %s7
  $region1: #{tpu_custom_call.1} parent=0
    #allocation2 [shape = 'u8[65536]{0}', space=vmem, size = 0x10000, scoped, tag = 'input window, operand 1, single buffered']
    #allocation3 [shape = 's32[1]{0}', space=sflag, size = 0x4, scoped, tag = 'scoped memory for tpu_custom_call.1']
    #allocation4 [shape = 's32[1]{0}', space=sflag, size = 0x4, scoped, tag = 'scoped memory for tpu_custom_call.1']
    #allocation5 [shape = 'u8[512]{0}', space=vmem, size = 0x400, scoped, tag = 'output window, operand 0, single buffered']
    #allocation6 [shape = 'u8[512]{0}', space=vmem, size = 0x400, scoped, tag = 'output window, operand 1, single buffered']
    #allocation7 [shape = 's32[1]{0}', space=sflag, size = 0x4, scoped, tag = 'scoped memory for tpu_custom_call.1']
    %11 = vsyncpa [#allocation3], 0
    %12 = vsyncpa [#allocation4], 0
    %13 = vsyncpa [#allocation7], 0
    // Predicated region
    $region2: #{tpu_custom_call.1} parent=1 // pred_check
      _
    $region3: #{tpu_custom_call.1} parent=1 // pred_check_branch
      %15 = sbr.rel (0) target = $region5
    $region4: #{tpu_custom_call.1} parent=1 // pred_region
      _
    $region5: #{tpu_custom_call.1} parent=1 // pred_fallthru
      _
    // Predicated region
    $region6: #{tpu_custom_call.1} parent=1 // pred_check
      _
    $region7: #{tpu_custom_call.1} parent=1 // pred_check_branch
      %17 = sbr.rel (0) target = $region9
    $region8: #{tpu_custom_call.1} parent=1 // pred_region
      %s19 = ssub.s32 2048, 2048
      %20 = vsyncadd [#allocation3], %s19
      %s21 = sshll.u32 [#allocation2], 4
      %s22 = int_to_ptr.vmem [resolvable:$true] %s21
      %27 = dma.hbm_to_vmem [thread:$0]  %s1, 2048, %s22, [#allocation3], 128, 128, 8
    $region9: #{tpu_custom_call.1} parent=1 // pred_fallthru
      _
    // Predicated region
    $region10: #{tpu_custom_call.1} parent=1 // pred_check
      _
    $region11: #{tpu_custom_call.1} parent=1 // pred_check_branch
      %29 = sbr.rel (0) target = $region13
    $region12: #{tpu_custom_call.1} parent=1 // pred_region
      _
    $region13: #{tpu_custom_call.1} parent=1 // pred_fallthru
      _
    // Predicated region
    $region14: #{tpu_custom_call.1} parent=1 // pred_check
      _
    $region15: #{tpu_custom_call.1} parent=1 // pred_check_branch
      %31 = sbr.rel (0) target = $region17
    $region16: #{tpu_custom_call.1} parent=1 // pred_region
      _
    $region17: #{tpu_custom_call.1} parent=1 // pred_fallthru
      _
    // Predicated region
    $region18: #{tpu_custom_call.1} parent=1 // pred_check
      _
    $region19: #{tpu_custom_call.1} parent=1 // pred_check_branch
      %33 = sbr.rel (0) target = $region21
    $region20: #{tpu_custom_call.1} parent=1 // pred_region
      %34 = dma.done [#allocation3], 2048
    $region21: #{tpu_custom_call.1} parent=1 // pred_fallthru
      _
    %p35 = scmp.eq.s32.totalorder 0, 0
    // Predicated region
    $region22: #{tpu_custom_call.1} parent=1 // pred_check
      %p36 = pneg %p35
    $region23: #{tpu_custom_call.1} parent=1 // pred_check_branch
      %38 = sbr.rel (%p36) target = $region25
    $region24: #{tpu_custom_call.1} parent=1 // pred_region
      %39 = vst [vmem:[#allocation5] sm:$0x1] inf
      %40 = vst [vmem:[#allocation6] sm:$0x1] 0.0
    $region25: #{tpu_custom_call.1} parent=1 // pred_fallthru
      _
    %v41 = vld [vmem:[#allocation2] sm:$0xff]
    %v42 = vld [vmem:[#allocation2 + $0x8] sm:$0xff]
    %v43 = vld [vmem:[#allocation2 + $0x10] sm:$0xff]
    %v44 = vld [vmem:[#allocation2 + $0x18] sm:$0xff]
    %v45 = vld [vmem:[#allocation2 + $0x20] sm:$0xff]
    %v46 = vld [vmem:[#allocation2 + $0x28] sm:$0xff]
    %v47 = vld [vmem:[#allocation2 + $0x30] sm:$0xff]
    %v48 = vld [vmem:[#allocation2 + $0x38] sm:$0xff]
    %v49 = vld [vmem:[#allocation2 + $0x40] sm:$0xff]
    %v50 = vld [vmem:[#allocation2 + $0x48] sm:$0xff]
    %v51 = vld [vmem:[#allocation2 + $0x50] sm:$0xff]
    %v52 = vld [vmem:[#allocation2 + $0x58] sm:$0xff]
    %v53 = vld [vmem:[#allocation2 + $0x60] sm:$0xff]
    %v54 = vld [vmem:[#allocation2 + $0x68] sm:$0xff]
    %v55 = vld [vmem:[#allocation2 + $0x70] sm:$0xff]
    %v56 = vld [vmem:[#allocation2 + $0x78] sm:$0xff]
    %v57 = vld [vmem:[%s0] sm:$0xff]
    %v58 = vld [vmem:[%s0 + $0x8] sm:$0xff]
    %v59 = vld [vmem:[%s0 + $0x10] sm:$0xff]
    %v60 = vld [vmem:[%s0 + $0x18] sm:$0xff]
    %v61 = vld [vmem:[%s0 + $0x20] sm:$0xff]
    %v62 = vld [vmem:[%s0 + $0x28] sm:$0xff]
    %v63 = vld [vmem:[%s0 + $0x30] sm:$0xff]
    %v64 = vld [vmem:[%s0 + $0x38] sm:$0xff]
    %v65 = vld [vmem:[%s0 + $0x40] sm:$0xff]
    %v66 = vld [vmem:[%s0 + $0x48] sm:$0xff]
    %v67 = vld [vmem:[%s0 + $0x50] sm:$0xff]
    %v68 = vld [vmem:[%s0 + $0x58] sm:$0xff]
    %v69 = vld [vmem:[%s0 + $0x60] sm:$0xff]
    %v70 = vld [vmem:[%s0 + $0x68] sm:$0xff]
    %v71 = vld [vmem:[%s0 + $0x70] sm:$0xff]
    %v72 = vld [vmem:[%s0 + $0x78] sm:$0xff]
    %73 = vmatprep.subr.mxu0 0.0
    %74 = vmatpush1.xpose.msra.mxu0 %v57
    %75 = vmatprep.subr.mxu0 0.0
    %76 = vmatpush1.xpose.msra.mxu0 %v58
    %77 = vmatprep.subr.mxu0 0.0
    %78 = vmatpush1.xpose.msra.mxu0 %v59
    %79 = vmatprep.subr.mxu0 0.0
    %80 = vmatpush1.xpose.msra.mxu0 %v60
    %81 = vmatprep.subr.mxu0 0.0
    %82 = vmatpush1.xpose.msra.mxu0 %v61
    %83 = vmatprep.subr.mxu0 0.0
    %84 = vmatpush1.xpose.msra.mxu0 %v62
    %85 = vmatprep.subr.mxu0 0.0
    %86 = vmatpush1.xpose.msra.mxu0 %v63
    %87 = vmatprep.subr.mxu0 0.0
    %88 = vmatpush1.xpose.msra.mxu0 %v64
    %89 = vmatprep.subr.mxu0 0.0
    %90 = vmatpush1.xpose.msra.mxu0 %v65
    %91 = vmatprep.subr.mxu0 0.0
    %92 = vmatpush1.xpose.msra.mxu0 %v66
    %93 = vmatprep.subr.mxu0 0.0
    %94 = vmatpush1.xpose.msra.mxu0 %v67
    %95 = vmatprep.subr.mxu0 0.0
    %96 = vmatpush1.xpose.msra.mxu0 %v68
    %97 = vmatprep.subr.mxu0 0.0
    %98 = vmatpush1.xpose.msra.mxu0 %v69
    %99 = vmatprep.subr.mxu0 0.0
    %100 = vmatpush1.xpose.msra.mxu0 %v70
    %101 = vmatprep.subr.mxu0 0.0
    %102 = vmatpush1.xpose.msra.mxu0 %v71
    %103 = vmatprep.subr.mxu0 0.0
    %104 = vmatpush1.xpose.msra.mxu0 %v72
    %105 = vmatprep.subr.mxu0 0.0
    %106 = vmatpush1.xpose.msra.mxu0 0.0
    %107 = vmatprep.subr.mxu0 0.0
    %108 = vmatpush1.xpose.msra.mxu0 0.0
    %109 = vmatprep.subr.mxu0 0.0
    %110 = vmatpush1.xpose.msra.mxu0 0.0
    %111 = vmatprep.subr.mxu0 0.0
    %112 = vmatpush1.xpose.msra.mxu0 0.0
    %113 = vmatprep.subr.mxu0 0.0
    %114 = vmatpush1.xpose.msra.mxu0 0.0
    %115 = vmatprep.subr.mxu0 0.0
    %116 = vmatpush1.xpose.msra.mxu0 0.0
    %117 = vmatprep.subr.mxu0 0.0
    %118 = vmatpush1.xpose.msra.mxu0 0.0
    %119 = vmatprep.subr.mxu0 0.0
    %120 = vmatpush1.xpose.msra.mxu0 0.0
    %121 = vmatprep.subr.mxu0 0.0
    %122 = vmatpush1.xpose.msra.mxu0 0.0
    %123 = vmatprep.subr.mxu0 0.0
    %124 = vmatpush1.xpose.msra.mxu0 0.0
    %125 = vmatprep.subr.mxu0 0.0
    %126 = vmatpush1.xpose.msra.mxu0 0.0
    %127 = vmatprep.subr.mxu0 0.0
    %128 = vmatpush1.xpose.msra.mxu0 0.0
    %129 = vmatprep.subr.mxu0 0.0
    %130 = vmatpush1.xpose.msra.mxu0 0.0
    %131 = vmatprep.subr.mxu0 0.0
    %132 = vmatpush1.xpose.msra.mxu0 0.0
    %133 = vmatprep.subr.mxu0 0.0
    %134 = vmatpush1.xpose.msra.mxu0 0.0
    %135 = vmatprep.subr.mxu0 0.0
    %136 = vmatpush1.xpose.msra.mxu0 0.0
    %137 = vmatprep.mubr.f32.mxu0 0.0
    %138 = vmatmul.mubr.f32.gmra.mrb[0].mxu0 %v41
    %v139 = vpop.f32.mrb[0].mxu0
    %v140 = vadd.f32 0.0, %v139
    %v141 = vpop.f32.mrb[0].mxu0
    %142 = vmatprep.mubr.f32.mxu0 0.0
    %143 = vmatmul.mubr.f32.gmra.mrb[0].mxu0 %v42
    %v144 = vpop.f32.mrb[0].mxu0
    %v145 = vadd.f32 0.0, %v144
    %v146 = vpop.f32.mrb[0].mxu0
    %147 = vmatprep.mubr.f32.mxu0 0.0
    %148 = vmatmul.mubr.f32.gmra.mrb[0].mxu0 %v43
    %v149 = vpop.f32.mrb[0].mxu0
    %v150 = vadd.f32 0.0, %v149
    %v151 = vpop.f32.mrb[0].mxu0
    %152 = vmatprep.mubr.f32.mxu0 0.0
    %153 = vmatmul.mubr.f32.gmra.mrb[0].mxu0 %v44
    %v154 = vpop.f32.mrb[0].mxu0
    %v155 = vadd.f32 0.0, %v154
    %v156 = vpop.f32.mrb[0].mxu0
    %157 = vmatprep.mubr.f32.mxu0 0.0
    %158 = vmatmul.mubr.f32.gmra.mrb[0].mxu0 %v45
    %v159 = vpop.f32.mrb[0].mxu0
    %v160 = vadd.f32 0.0, %v159
    %v161 = vpop.f32.mrb[0].mxu0
    %162 = vmatprep.mubr.f32.mxu0 0.0
    %163 = vmatmul.mubr.f32.gmra.mrb[0].mxu0 %v46
    %v164 = vpop.f32.mrb[0].mxu0
    %v165 = vadd.f32 0.0, %v164
    %v166 = vpop.f32.mrb[0].mxu0
    %167 = vmatprep.mubr.f32.mxu0 0.0
    %168 = vmatmul.mubr.f32.gmra.mrb[0].mxu0 %v47
    %v169 = vpop.f32.mrb[0].mxu0
    %v170 = vadd.f32 0.0, %v169
    %v171 = vpop.f32.mrb[0].mxu0
    %172 = vmatprep.mubr.f32.mxu0 0.0
    %173 = vmatmul.mubr.f32.gmra.mrb[0].mxu0 %v48
    %v174 = vpop.f32.mrb[0].mxu0
    %v175 = vadd.f32 0.0, %v174
    %v176 = vpop.f32.mrb[0].mxu0
    %177 = vmatprep.mubr.f32.mxu0 0.0
    %178 = vmatmul.mubr.f32.gmra.mrb[0].mxu0 %v49
    %v179 = vpop.f32.mrb[0].mxu0
    %v180 = vadd.f32 0.0, %v179
    %v181 = vpop.f32.mrb[0].mxu0
    %182 = vmatprep.mubr.f32.mxu0 0.0
    %183 = vmatmul.mubr.f32.gmra.mrb[0].mxu0 %v50
    %v184 = vpop.f32.mrb[0].mxu0
    %v185 = vadd.f32 0.0, %v184
    %v186 = vpop.f32.mrb[0].mxu0
    %187 = vmatprep.mubr.f32.mxu0 0.0
    %188 = vmatmul.mubr.f32.gmra.mrb[0].mxu0 %v51
    %v189 = vpop.f32.mrb[0].mxu0
    %v190 = vadd.f32 0.0, %v189
    %v191 = vpop.f32.mrb[0].mxu0
    %192 = vmatprep.mubr.f32.mxu0 0.0
    %193 = vmatmul.mubr.f32.gmra.mrb[0].mxu0 %v52
    %v194 = vpop.f32.mrb[0].mxu0
    %v195 = vadd.f32 0.0, %v194
    %v196 = vpop.f32.mrb[0].mxu0
    %197 = vmatprep.mubr.f32.mxu0 0.0
    %198 = vmatmul.mubr.f32.gmra.mrb[0].mxu0 %v53
    %v199 = vpop.f32.mrb[0].mxu0
    %v200 = vadd.f32 0.0, %v199
    %v201 = vpop.f32.mrb[0].mxu0
    %202 = vmatprep.mubr.f32.mxu0 0.0
    %203 = vmatmul.mubr.f32.gmra.mrb[0].mxu0 %v54
    %v204 = vpop.f32.mrb[0].mxu0
    %v205 = vadd.f32 0.0, %v204
    %v206 = vpop.f32.mrb[0].mxu0
    %207 = vmatprep.mubr.f32.mxu0 0.0
    %208 = vmatmul.mubr.f32.gmra.mrb[0].mxu0 %v55
    %v209 = vpop.f32.mrb[0].mxu0
    %v210 = vadd.f32 0.0, %v209
    %v211 = vpop.f32.mrb[0].mxu0
    %212 = vmatprep.mubr.f32.mxu0 0.0
    %213 = vmatmul.mubr.f32.gmra.mrb[0].mxu0 %v56
    %v214 = vpop.f32.mrb[0].mxu0
    %v215 = vadd.f32 0.0, %v214
    %v216 = vpop.f32.mrb[0].mxu0
    %217 = vdwg.mxu0
    %v218 = vld [vmem:[%s3] sm:$0xff]
    %v219 = vld [vmem:[%s3 + $0x8] sm:$0xff]
    %v220 = vld [vmem:[%s3 + $0x10] sm:$0xff]
    %v221 = vld [vmem:[%s3 + $0x18] sm:$0xff]
    %v222 = vld [vmem:[%s3 + $0x20] sm:$0xff]
    %v223 = vld [vmem:[%s3 + $0x28] sm:$0xff]
    %v224 = vld [vmem:[%s3 + $0x30] sm:$0xff]
    %v225 = vld [vmem:[%s3 + $0x38] sm:$0xff]
    %v226 = vld [vmem:[%s3 + $0x40] sm:$0xff]
    %v227 = vld [vmem:[%s3 + $0x48] sm:$0xff]
    %v228 = vld [vmem:[%s3 + $0x50] sm:$0xff]
    %v229 = vld [vmem:[%s3 + $0x58] sm:$0xff]
    %v230 = vld [vmem:[%s3 + $0x60] sm:$0xff]
    %v231 = vld [vmem:[%s3 + $0x68] sm:$0xff]
    %v232 = vld [vmem:[%s3 + $0x70] sm:$0xff]
    %v233 = vld [vmem:[%s3 + $0x78] sm:$0xff]
    %v234 = vld [vmem:[%s2] sm:$0x1]
    %235 = vset.pattern.permute.xlu0 0
    %236 = vperm.xlu0 %235, %v218
    %v237 = vpop.permute.xlu0 %236
    %238 = vset.pattern.permute.xlu0 0
    %239 = vperm.xlu0 %238, %v219
    %v240 = vpop.permute.xlu0 %239
    %241 = vset.pattern.permute.xlu0 0
    %242 = vperm.xlu0 %241, %v220
    %v243 = vpop.permute.xlu0 %242
    %244 = vset.pattern.permute.xlu0 0
    %245 = vperm.xlu0 %244, %v221
    %v246 = vpop.permute.xlu0 %245
    %247 = vset.pattern.permute.xlu0 0
    %248 = vperm.xlu0 %247, %v222
    %v249 = vpop.permute.xlu0 %248
    %250 = vset.pattern.permute.xlu0 0
    %251 = vperm.xlu0 %250, %v223
    %v252 = vpop.permute.xlu0 %251
    %253 = vset.pattern.permute.xlu0 0
    %254 = vperm.xlu0 %253, %v224
    %v255 = vpop.permute.xlu0 %254
    %256 = vset.pattern.permute.xlu0 0
    %257 = vperm.xlu0 %256, %v225
    %v258 = vpop.permute.xlu0 %257
    %259 = vset.pattern.permute.xlu0 0
    %260 = vperm.xlu0 %259, %v226
    %v261 = vpop.permute.xlu0 %260
    %262 = vset.pattern.permute.xlu0 0
    %263 = vperm.xlu0 %262, %v227
    %v264 = vpop.permute.xlu0 %263
    %265 = vset.pattern.permute.xlu0 0
    %266 = vperm.xlu0 %265, %v228
    %v267 = vpop.permute.xlu0 %266
    %268 = vset.pattern.permute.xlu0 0
    %269 = vperm.xlu0 %268, %v229
    %v270 = vpop.permute.xlu0 %269
    %271 = vset.pattern.permute.xlu0 0
    %272 = vperm.xlu0 %271, %v230
    %v273 = vpop.permute.xlu0 %272
    %274 = vset.pattern.permute.xlu0 0
    %275 = vperm.xlu0 %274, %v231
    %v276 = vpop.permute.xlu0 %275
    %277 = vset.pattern.permute.xlu0 0
    %278 = vperm.xlu0 %277, %v232
    %v279 = vpop.permute.xlu0 %278
    %280 = vset.pattern.permute.xlu0 0
    %281 = vperm.xlu0 %280, %v233
    %v282 = vpop.permute.xlu0 %281
    %v283 = vlaneseq
    %v284 = vshrl.u32 %v283, 7
    %v285 = vsub.s32 0, %v284
    %v286 = vrot.slane %v234, %v285
    %vm287 = vcmp.ne.s32.totalorder %v237, %v286
    %vm288 = vcmp.ne.s32.totalorder %v240, %v286
    %vm289 = vcmp.ne.s32.totalorder %v243, %v286
    %vm290 = vcmp.ne.s32.totalorder %v246, %v286
    %vm291 = vcmp.ne.s32.totalorder %v249, %v286
    %vm292 = vcmp.ne.s32.totalorder %v252, %v286
    %vm293 = vcmp.ne.s32.totalorder %v255, %v286
    %vm294 = vcmp.ne.s32.totalorder %v258, %v286
    %vm295 = vcmp.ne.s32.totalorder %v261, %v286
    %vm296 = vcmp.ne.s32.totalorder %v264, %v286
    %vm297 = vcmp.ne.s32.totalorder %v267, %v286
    %vm298 = vcmp.ne.s32.totalorder %v270, %v286
    %vm299 = vcmp.ne.s32.totalorder %v273, %v286
    %vm300 = vcmp.ne.s32.totalorder %v276, %v286
    %vm301 = vcmp.ne.s32.totalorder %v279, %v286
    %vm302 = vcmp.ne.s32.totalorder %v282, %v286
    %vm303 = vcmp.ge.s32.totalorder %v218, 0
    %vm304 = vcmp.ge.s32.totalorder %v219, 0
    %vm305 = vcmp.ge.s32.totalorder %v220, 0
    %vm306 = vcmp.ge.s32.totalorder %v221, 0
    %vm307 = vcmp.ge.s32.totalorder %v222, 0
    %vm308 = vcmp.ge.s32.totalorder %v223, 0
    %vm309 = vcmp.ge.s32.totalorder %v224, 0
    %vm310 = vcmp.ge.s32.totalorder %v225, 0
    %vm311 = vcmp.ge.s32.totalorder %v226, 0
    %vm312 = vcmp.ge.s32.totalorder %v227, 0
    %vm313 = vcmp.ge.s32.totalorder %v228, 0
    %vm314 = vcmp.ge.s32.totalorder %v229, 0
    %vm315 = vcmp.ge.s32.totalorder %v230, 0
    %vm316 = vcmp.ge.s32.totalorder %v231, 0
    %vm317 = vcmp.ge.s32.totalorder %v232, 0
    %vm318 = vcmp.ge.s32.totalorder %v233, 0
    %v319 = vsel %vm303, 1, 0
    %v320 = vsel %vm304, 1, 0
    %v321 = vsel %vm305, 1, 0
    %v322 = vsel %vm306, 1, 0
    %v323 = vsel %vm307, 1, 0
    %v324 = vsel %vm308, 1, 0
    %v325 = vsel %vm309, 1, 0
    %v326 = vsel %vm310, 1, 0
    %v327 = vsel %vm311, 1, 0
    %v328 = vsel %vm312, 1, 0
    %v329 = vsel %vm313, 1, 0
    %v330 = vsel %vm314, 1, 0
    %v331 = vsel %vm315, 1, 0
    %v332 = vsel %vm316, 1, 0
    %v333 = vsel %vm317, 1, 0
    %v334 = vsel %vm318, 1, 0
    %335 = vset.pattern.permute.xlu0 0
    %336 = vperm.xlu0 %335, %v319
    %v337 = vpop.permute.xlu0 %336
    %338 = vset.pattern.permute.xlu0 0
    %339 = vperm.xlu0 %338, %v320
    %v340 = vpop.permute.xlu0 %339
    %341 = vset.pattern.permute.xlu0 0
    %342 = vperm.xlu0 %341, %v321
    %v343 = vpop.permute.xlu0 %342
    %344 = vset.pattern.permute.xlu0 0
    %345 = vperm.xlu0 %344, %v322
    %v346 = vpop.permute.xlu0 %345
    %347 = vset.pattern.permute.xlu0 0
    %348 = vperm.xlu0 %347, %v323
    %v349 = vpop.permute.xlu0 %348
    %350 = vset.pattern.permute.xlu0 0
    %351 = vperm.xlu0 %350, %v324
    %v352 = vpop.permute.xlu0 %351
    %353 = vset.pattern.permute.xlu0 0
    %354 = vperm.xlu0 %353, %v325
    %v355 = vpop.permute.xlu0 %354
    %356 = vset.pattern.permute.xlu0 0
    %357 = vperm.xlu0 %356, %v326
    %v358 = vpop.permute.xlu0 %357
    %359 = vset.pattern.permute.xlu0 0
    %360 = vperm.xlu0 %359, %v327
    %v361 = vpop.permute.xlu0 %360
    %362 = vset.pattern.permute.xlu0 0
    %363 = vperm.xlu0 %362, %v328
    %v364 = vpop.permute.xlu0 %363
    %365 = vset.pattern.permute.xlu0 0
    %366 = vperm.xlu0 %365, %v329
    %v367 = vpop.permute.xlu0 %366
    %368 = vset.pattern.permute.xlu0 0
    %369 = vperm.xlu0 %368, %v330
    %v370 = vpop.permute.xlu0 %369
    %371 = vset.pattern.permute.xlu0 0
    %372 = vperm.xlu0 %371, %v331
    %v373 = vpop.permute.xlu0 %372
    %374 = vset.pattern.permute.xlu0 0
    %375 = vperm.xlu0 %374, %v332
    %v376 = vpop.permute.xlu0 %375
    %377 = vset.pattern.permute.xlu0 0
    %378 = vperm.xlu0 %377, %v333
    %v379 = vpop.permute.xlu0 %378
    %380 = vset.pattern.permute.xlu0 0
    %381 = vperm.xlu0 %380, %v334
    %v382 = vpop.permute.xlu0 %381
    %vm383 = vcmp.eq.s32.totalorder %v337, 1
    %vm384 = vcmp.eq.s32.totalorder %v340, 1
    %vm385 = vcmp.eq.s32.totalorder %v343, 1
    %vm386 = vcmp.eq.s32.totalorder %v346, 1
    %vm387 = vcmp.eq.s32.totalorder %v349, 1
    %vm388 = vcmp.eq.s32.totalorder %v352, 1
    %vm389 = vcmp.eq.s32.totalorder %v355, 1
    %vm390 = vcmp.eq.s32.totalorder %v358, 1
    %vm391 = vcmp.eq.s32.totalorder %v361, 1
    %vm392 = vcmp.eq.s32.totalorder %v364, 1
    %vm393 = vcmp.eq.s32.totalorder %v367, 1
    %vm394 = vcmp.eq.s32.totalorder %v370, 1
    %vm395 = vcmp.eq.s32.totalorder %v373, 1
    %vm396 = vcmp.eq.s32.totalorder %v376, 1
    %vm397 = vcmp.eq.s32.totalorder %v379, 1
    %vm398 = vcmp.eq.s32.totalorder %v382, 1
    %vm399 = vmand %vm287, %vm383
    %vm400 = vmand %vm288, %vm384
    %vm401 = vmand %vm289, %vm385
    %vm402 = vmand %vm290, %vm386
    %vm403 = vmand %vm291, %vm387
    %vm404 = vmand %vm292, %vm388
    %vm405 = vmand %vm293, %vm389
    %vm406 = vmand %vm294, %vm390
    %vm407 = vmand %vm295, %vm391
    %vm408 = vmand %vm296, %vm392
    %vm409 = vmand %vm297, %vm393
    %vm410 = vmand %vm298, %vm394
    %vm411 = vmand %vm299, %vm395
    %vm412 = vmand %vm300, %vm396
    %vm413 = vmand %vm301, %vm397
    %vm414 = vmand %vm302, %vm398
    %v415 = vld [vmem:[#allocation6] sm:$0x1]
    %v416 = vsel %vm399, %v140, -inf
    %v417 = vsel %vm400, %v145, -inf
    %v418 = vsel %vm401, %v150, -inf
    %v419 = vsel %vm402, %v155, -inf
    %v420 = vsel %vm403, %v160, -inf
    %v421 = vsel %vm404, %v165, -inf
    %v422 = vsel %vm405, %v170, -inf
    %v423 = vsel %vm406, %v175, -inf
    %v424 = vsel %vm407, %v180, -inf
    %v425 = vsel %vm408, %v185, -inf
    %v426 = vsel %vm409, %v190, -inf
    %v427 = vsel %vm410, %v195, -inf
    %v428 = vsel %vm411, %v200, -inf
    %v429 = vsel %vm412, %v205, -inf
    %v430 = vsel %vm413, %v210, -inf
    %v431 = vsel %vm414, %v215, -inf
    %v432 = vmul.f32 %v416, 1.442695
    %v433 = vpow.pop %v432
    %v434 = vmul.f32 %v417, 1.442695
    %v435 = vpow.pop %v434
    %v436 = vmul.f32 %v418, 1.442695
    %v437 = vpow.pop %v436
    %v438 = vmul.f32 %v419, 1.442695
    %v439 = vpow.pop %v438
    %v440 = vmul.f32 %v420, 1.442695
    %v441 = vpow.pop %v440
    %v442 = vmul.f32 %v421, 1.442695
    %v443 = vpow.pop %v442
    %v444 = vmul.f32 %v422, 1.442695
    %v445 = vpow.pop %v444
    %v446 = vmul.f32 %v423, 1.442695
    %v447 = vpow.pop %v446
    %v448 = vmul.f32 %v424, 1.442695
    %v449 = vpow.pop %v448
    %v450 = vmul.f32 %v425, 1.442695
    %v451 = vpow.pop %v450
    %v452 = vmul.f32 %v426, 1.442695
    %v453 = vpow.pop %v452
    %v454 = vmul.f32 %v427, 1.442695
    %v455 = vpow.pop %v454
    %v456 = vmul.f32 %v428, 1.442695
    %v457 = vpow.pop %v456
    %v458 = vmul.f32 %v429, 1.442695
    %v459 = vpow.pop %v458
    %v460 = vmul.f32 %v430, 1.442695
    %v461 = vpow.pop %v460
    %v462 = vmul.f32 %v431, 1.442695
    %v463 = vpow.pop %v462
    %v464 = vadd.f32 %v433, %v435
    %v465 = vadd.f32 %v464, %v437
    %v466 = vadd.f32 %v465, %v439
    %v467 = vadd.f32 %v466, %v441
    %v468 = vadd.f32 %v467, %v443
    %v469 = vadd.f32 %v468, %v445
    %v470 = vadd.f32 %v469, %v447
    %v471 = vadd.f32 %v470, %v449
    %v472 = vadd.f32 %v471, %v451
    %v473 = vadd.f32 %v472, %v453
    %v474 = vadd.f32 %v473, %v455
    %v475 = vadd.f32 %v474, %v457
    %v476 = vadd.f32 %v475, %v459
    %v477 = vadd.f32 %v476, %v461
    %v478 = vadd.f32 %v477, %v463
    %v479 = vrot.slane %v478, 4
    %v480 = vadd.f32 %v478, %v479
    %v481 = vrot.slane %v480, 2
    %v482 = vadd.f32 %v480, %v481
    %v483 = vrot.slane %v482, 1
    %v484 = vadd.f32 %v482, %v483
    %v485 = vadd.f32 %v415, %v484
    %486 = vst [vmem:[#allocation6] sm:$0x1] %v485
    %s487 = smul.u32 0, 128
    %p488 = scmp.lt.s32.totalorder %s487, 32
    // Predicated region
    $region26: #{tpu_custom_call.1} parent=1 // pred_check
      %p489 = pneg %p488
    $region27: #{tpu_custom_call.1} parent=1 // pred_check_branch
      %491 = sbr.rel (%p489) target = $region29
    $region28: #{tpu_custom_call.1} parent=1 // pred_region
      %v492 = vlaneseq
      %v493 = vshrl.u32 %v492, 7
      %v494 = vadd.s32 %v493, 8
      %v495 = vadd.s32 %v493, 16
      %v496 = vadd.s32 %v493, 24
      %v497 = vadd.s32 %v493, 32
      %v498 = vadd.s32 %v493, 40
      %v499 = vadd.s32 %v493, 48
      %v500 = vadd.s32 %v493, 56
      %v501 = vadd.s32 %v493, 64
      %v502 = vadd.s32 %v493, 72
      %v503 = vadd.s32 %v493, 80
      %v504 = vadd.s32 %v493, 88
      %v505 = vadd.s32 %v493, 96
      %v506 = vadd.s32 %v493, 104
      %v507 = vadd.s32 %v493, 112
      %v508 = vadd.s32 %v493, 120
      %v509 = vstv %s487
      %v510 = vadd.s32 %v509, %v493
      %v511 = vadd.s32 %v509, %v494
      %v512 = vadd.s32 %v509, %v495
      %v513 = vadd.s32 %v509, %v496
      %v514 = vadd.s32 %v509, %v497
      %v515 = vadd.s32 %v509, %v498
      %v516 = vadd.s32 %v509, %v499
      %v517 = vadd.s32 %v509, %v500
      %v518 = vadd.s32 %v509, %v501
      %v519 = vadd.s32 %v509, %v502
      %v520 = vadd.s32 %v509, %v503
      %v521 = vadd.s32 %v509, %v504
      %v522 = vadd.s32 %v509, %v505
      %v523 = vadd.s32 %v509, %v506
      %v524 = vadd.s32 %v509, %v507
      %v525 = vadd.s32 %v509, %v508
      %vm526 = vcmp.eq.s32.totalorder %v237, %v286
      %vm527 = vcmp.eq.s32.totalorder %v240, %v286
      %vm528 = vcmp.eq.s32.totalorder %v243, %v286
      %vm529 = vcmp.eq.s32.totalorder %v246, %v286
      %vm530 = vcmp.eq.s32.totalorder %v249, %v286
      %vm531 = vcmp.eq.s32.totalorder %v252, %v286
      %vm532 = vcmp.eq.s32.totalorder %v255, %v286
      %vm533 = vcmp.eq.s32.totalorder %v258, %v286
      %vm534 = vcmp.eq.s32.totalorder %v261, %v286
      %vm535 = vcmp.eq.s32.totalorder %v264, %v286
      %vm536 = vcmp.eq.s32.totalorder %v267, %v286
      %vm537 = vcmp.eq.s32.totalorder %v270, %v286
      %vm538 = vcmp.eq.s32.totalorder %v273, %v286
      %vm539 = vcmp.eq.s32.totalorder %v276, %v286
      %vm540 = vcmp.eq.s32.totalorder %v279, %v286
      %vm541 = vcmp.eq.s32.totalorder %v282, %v286
      %vm542 = vcmp.lt.s32.totalorder %v510, 32
      %vm543 = vcmp.lt.s32.totalorder %v511, 32
      %vm544 = vcmp.lt.s32.totalorder %v512, 32
      %vm545 = vcmp.lt.s32.totalorder %v513, 32
      %vm546 = vcmp.lt.s32.totalorder %v514, 32
      %vm547 = vcmp.lt.s32.totalorder %v515, 32
      %vm548 = vcmp.lt.s32.totalorder %v516, 32
      %vm549 = vcmp.lt.s32.totalorder %v517, 32
      %vm550 = vcmp.lt.s32.totalorder %v518, 32
      %vm551 = vcmp.lt.s32.totalorder %v519, 32
      %vm552 = vcmp.lt.s32.totalorder %v520, 32
      %vm553 = vcmp.lt.s32.totalorder %v521, 32
      %vm554 = vcmp.lt.s32.totalorder %v522, 32
      %vm555 = vcmp.lt.s32.totalorder %v523, 32
      %vm556 = vcmp.lt.s32.totalorder %v524, 32
      %vm557 = vcmp.lt.s32.totalorder %v525, 32
      %v558 = vsel %vm542, 1, 0
      %v559 = vsel %vm543, 1, 0
      %v560 = vsel %vm544, 1, 0
      %v561 = vsel %vm545, 1, 0
      %v562 = vsel %vm546, 1, 0
      %v563 = vsel %vm547, 1, 0
      %v564 = vsel %vm548, 1, 0
      %v565 = vsel %vm549, 1, 0
      %v566 = vsel %vm550, 1, 0
      %v567 = vsel %vm551, 1, 0
      %v568 = vsel %vm552, 1, 0
      %v569 = vsel %vm553, 1, 0
      %v570 = vsel %vm554, 1, 0
      %v571 = vsel %vm555, 1, 0
      %v572 = vsel %vm556, 1, 0
      %v573 = vsel %vm557, 1, 0
      %vm574 = vcmp.eq.s32.totalorder %v558, 1
      %vm575 = vcmp.eq.s32.totalorder %v559, 1
      %vm576 = vcmp.eq.s32.totalorder %v560, 1
      %vm577 = vcmp.eq.s32.totalorder %v561, 1
      %vm578 = vcmp.eq.s32.totalorder %v562, 1
      %vm579 = vcmp.eq.s32.totalorder %v563, 1
      %vm580 = vcmp.eq.s32.totalorder %v564, 1
      %vm581 = vcmp.eq.s32.totalorder %v565, 1
      %vm582 = vcmp.eq.s32.totalorder %v566, 1
      %vm583 = vcmp.eq.s32.totalorder %v567, 1
      %vm584 = vcmp.eq.s32.totalorder %v568, 1
      %vm585 = vcmp.eq.s32.totalorder %v569, 1
      %vm586 = vcmp.eq.s32.totalorder %v570, 1
      %vm587 = vcmp.eq.s32.totalorder %v571, 1
      %vm588 = vcmp.eq.s32.totalorder %v572, 1
      %vm589 = vcmp.eq.s32.totalorder %v573, 1
      %vm590 = vmand %vm526, %vm574
      %vm591 = vmand %vm527, %vm575
      %vm592 = vmand %vm528, %vm576
      %vm593 = vmand %vm529, %vm577
      %vm594 = vmand %vm530, %vm578
      %vm595 = vmand %vm531, %vm579
      %vm596 = vmand %vm532, %vm580
      %vm597 = vmand %vm533, %vm581
      %vm598 = vmand %vm534, %vm582
      %vm599 = vmand %vm535, %vm583
      %vm600 = vmand %vm536, %vm584
      %vm601 = vmand %vm537, %vm585
      %vm602 = vmand %vm538, %vm586
      %vm603 = vmand %vm539, %vm587
      %vm604 = vmand %vm540, %vm588
      %vm605 = vmand %vm541, %vm589
      %v606 = vld [vmem:[#allocation5] sm:$0x1]
      %v607 = vsel %vm590, %v140, inf
      %v608 = vsel %vm591, %v145, inf
      %v609 = vsel %vm592, %v150, inf
      %v610 = vsel %vm593, %v155, inf
      %v611 = vsel %vm594, %v160, inf
      %v612 = vsel %vm595, %v165, inf
      %v613 = vsel %vm596, %v170, inf
      %v614 = vsel %vm597, %v175, inf
      %v615 = vsel %vm598, %v180, inf
      %v616 = vsel %vm599, %v185, inf
      %v617 = vsel %vm600, %v190, inf
      %v618 = vsel %vm601, %v195, inf
      %v619 = vsel %vm602, %v200, inf
      %v620 = vsel %vm603, %v205, inf
      %v621 = vsel %vm604, %v210, inf
      %v622 = vsel %vm605, %v215, inf
      %v623 = vmin.f32 %v607, %v611
      %v624 = vmin.f32 %v608, %v612
      %v625 = vmin.f32 %v609, %v613
      %v626 = vmin.f32 %v610, %v614
      %v627 = vmin.f32 %v623, %v615
      %v628 = vmin.f32 %v624, %v616
      %v629 = vmin.f32 %v625, %v617
      %v630 = vmin.f32 %v626, %v618
      %v631 = vmin.f32 %v627, %v619
      %v632 = vmin.f32 %v628, %v620
      %v633 = vmin.f32 %v629, %v621
      %v634 = vmin.f32 %v630, %v622
      %v635 = vmin.f32 %v631, %v632
      %v636 = vmin.f32 %v633, %v634
      %v637 = vmin.f32 %v635, %v636
      %v638 = vrot.slane %v637, 4
      %v639 = vmin.f32 %v637, %v638
      %v640 = vrot.slane %v639, 2
      %v641 = vmin.f32 %v639, %v640
      %v642 = vrot.slane %v641, 1
      %v643 = vmin.f32 %v641, %v642
      %v644 = vmin.f32 %v606, %v643
      %645 = vst [vmem:[#allocation5] sm:$0x1] %v644
    $region29: #{tpu_custom_call.1} parent=1 // pred_fallthru
      _
    // Predicated region
    $region30: #{tpu_custom_call.1} parent=1 // pred_check
      _
    $region31: #{tpu_custom_call.1} parent=1 // pred_check_branch
      %647 = sbr.rel (0) target = $region33
    $region32: #{tpu_custom_call.1} parent=1 // pred_region
      %s649 = ssub.s32 16, 16
      %650 = vsyncadd [#allocation4], %s649
      %s652 = sshll.u32 [#allocation5], 4
      %s653 = int_to_ptr.vmem [resolvable:$true] %s652
      %655 = dma.vmem_to_hbm [thread:$0]  %s653, 16, %s4, [#allocation4]
    $region33: #{tpu_custom_call.1} parent=1 // pred_fallthru
      _
    // Predicated region
    $region34: #{tpu_custom_call.1} parent=1 // pred_check
      _
    $region35: #{tpu_custom_call.1} parent=1 // pred_check_branch
      %657 = sbr.rel (0) target = $region37
    $region36: #{tpu_custom_call.1} parent=1 // pred_region
      %s659 = ssub.s32 16, 16
      %660 = vsyncadd [#allocation7], %s659
      %s662 = sshll.u32 [#allocation6], 4
      %s663 = int_to_ptr.vmem [resolvable:$true] %s662
      %665 = dma.vmem_to_hbm [thread:$0]  %s663, 16, %s5, [#allocation7]
    $region37: #{tpu_custom_call.1} parent=1 // pred_fallthru
      _
    // Predicated region
    $region38: #{tpu_custom_call.1} parent=1 // pred_check
      _
    $region39: #{tpu_custom_call.1} parent=1 // pred_check_branch
      %667 = sbr.rel (0) target = $region41
    $region40: #{tpu_custom_call.1} parent=1 // pred_region
      %668 = dma.done [#allocation4], 16
    $region41: #{tpu_custom_call.1} parent=1 // pred_fallthru
      _
    // Predicated region
    $region42: #{tpu_custom_call.1} parent=1 // pred_check
      _
    $region43: #{tpu_custom_call.1} parent=1 // pred_check_branch
      %670 = sbr.rel (0) target = $region45
    $region44: #{tpu_custom_call.1} parent=1 // pred_region
      %671 = dma.done [#allocation7], 16
    $region45: #{tpu_custom_call.1} parent=1 // pred_fallthru
      _
    %672 = vsyncpa [#allocation3], 1
    %673 = vsyncpa [#allocation4], 1
    %674 = vsyncpa [#allocation7], 1

</llo_original>
